<compile_context>
chip_gen: v6e
topology: v6e:2x2x1
jax: 0.10.0
libtpu: 0.0.40
codegen_flags: <defaults>
</compile_context>

<pallas_src>
import numpy as np
import jax
import jax.numpy as jnp
from jax.experimental import pallas as pl
from jax.experimental.pallas import tpu as pltpu

N_SAMPLES = 256                     # n_samples (small, even)
WIN = 128                           # hamming window length (fixed by the module)
F_BINS = N_SAMPLES // 2 + 1         # rfft bins = 129 (only used in the host-side fold)
DRAWS_PER_STEP = 16                 # bf16-native (16, 128) sublane tile
TOTAL_DRAWS = 64                    # batch of independent forward() draws per call


# ----------------------------------- kernel --------------------------------------------------

def _source_excitation_kernel(noise_ref, m_ref, out_ref):
    # (env * noise) -> rfft -> * transfer -> irfft, all pre-folded into m_ref (bf16).
    # One (16, 256) x (256, 256) MXU matmul per grid step, f32 accumulation; m_ref has a
    # constant index_map so it stays VMEM-resident across the whole grid.
    out_ref[...] = jnp.dot(noise_ref[...], m_ref[...],
                           preferred_element_type=jnp.float32)


def source_excitation_batch(m_final, noise):
    """noise: (total_draws, N) bf16; m_final: (N, N) bf16.
    Returns (total_draws, N) f32; each row is one forward() draw of the PyTorch module."""
    total, n = noise.shape
    assert total % DRAWS_PER_STEP == 0
    grid = (total // DRAWS_PER_STEP,)
    return pl.pallas_call(
        _source_excitation_kernel,
        out_shape=jax.ShapeDtypeStruct((total, n), jnp.float32),
        grid=grid,
        in_specs=[
            pl.BlockSpec((DRAWS_PER_STEP, n), lambda i: (i, 0)),   # per-step noise block
            pl.BlockSpec((n, n), lambda i: (0, 0)),                # M: DMA'd once, stays resident
        ],
        out_specs=pl.BlockSpec((DRAWS_PER_STEP, n), lambda i: (i, 0)),
        compiler_params=pltpu.CompilerParams(
            dimension_semantics=("parallel",)),                    # v7x: split draw axis across TCs
    )(noise, m_final)


# ------------------------------- host-side (one-time) glue -----------------------------------

def _hamming_periodic(m):
    # torch.hamming_window(m) default periodic=True
    n = np.arange(m)
    return (0.54 - 0.46 * np.cos(2.0 * np.pi * n / m)).astype(np.float32)


def _linear_interp(src, out_size):
    # matches F.interpolate(mode='linear', align_corners=False)
    L = src.shape[0]
    scale = L / out_size
    i = np.arange(out_size)
    x = np.maximum((i + 0.5) * scale - 0.5, 0.0)
    x0 = np.minimum(np.floor(x).astype(np.int64), L - 1)
    x1 = np.minimum(x0 + 1, L - 1)
    lam = (x - x0).astype(np.float32)
    return ((1.0 - lam) * src[x0] + lam * src[x1]).astype(np.float32)


def _dft_matrices(n):
    """Real matrices implementing rfft / irfft with norm='ortho' (even n), float64."""
    f = n // 2 + 1
    k = np.arange(f)[:, None]
    nn = np.arange(n)[None, :]
    ang = 2.0 * np.pi * k * nn / n
    scale = 1.0 / np.sqrt(n)
    cfT = (np.cos(ang) * scale).T                    # (N, F): Re part of rfft
    sfT = (-np.sin(ang) * scale).T                   # (N, F): Im part of rfft
    w = np.full((f, 1), 2.0)
    w[0, 0] = 1.0
    w[-1, 0] = 1.0                                   # DC / Nyquist appear once
    icos = (w * np.cos(ang) * scale)                 # (F, N)
    isin = (-w * np.sin(ang) * scale)                # (F, N)
    return cfT, sfT, icos, isin


def fold_forward_matrix(transfer_re, transfer_im, env_abs, n, dtype=jnp.bfloat16):
    """Fold env window, rfft, complex transfer multiply and irfft into one (N, N) matrix
    so that  forward(noise) == noise @ M.  One-time / per-parameter-update cost."""
    cfT, sfT, icos, isin = _dft_matrices(n)
    t_re = np.asarray(transfer_re, np.float64).reshape(-1, 1)        # (F, 1)
    t_im = np.asarray(transfer_im, np.float64).reshape(-1, 1)
    A = t_re * icos + t_im * isin                                    # (F, N)
    B = t_re * isin - t_im * icos                                    # (F, N)
    M = cfT @ A + sfT @ B                                            # (N, N)
    M = np.asarray(env_abs, np.float64).reshape(-1, 1) * M           # diag(env) @ M
    return jnp.asarray(M.astype(np.float32)).astype(dtype)


# -------------------------------------- demo / check -----------------------------------------

if __name__ == "__main__":
    key = jax.random.PRNGKey(0)
    k_tre, k_tim, k_noise, k_x = jax.random.split(key, 4)

    # --- deterministic parameter init (mirrors __init__) ---
    transfer_re = jax.random.uniform(k_tre, (F_BINS,), jnp.float32, -0.01, 0.01)
    transfer_im = jax.random.uniform(k_tim, (F_BINS,), jnp.float32, -0.01, 0.01)

    # buffer: hamming_window(128) -> linear interpolate to n_samples -> abs
    env_abs = np.abs(_linear_interp(_hamming_periodic(WIN), N_SAMPLES))      # (N,)

    # one-time fold of env + rfft + transfer + irfft into a single bf16 (N, N) matrix
    m_final = fold_forward_matrix(transfer_re, transfer_im, env_abs, N_SAMPLES)

    # x is accepted by the PyTorch forward but never used.
    x = jax.random.normal(k_x, (1, 1, N_SAMPLES), jnp.float32)

    # batch of independent U(-1, 1) noise draws (one row per forward() call)
    noise_f32 = jax.random.uniform(k_noise, (TOTAL_DRAWS, N_SAMPLES), jnp.float32, -1.0, 1.0)
    noise_bf16 = noise_f32.astype(jnp.bfloat16)

    out = source_excitation_batch(m_final, noise_bf16)
    out = jax.block_until_ready(out)

    # one forward() call's result, in the module's output shape
    forward_out = out[0].reshape(1, 1, N_SAMPLES)
    assert forward_out.shape == (1, 1, N_SAMPLES) and forward_out.dtype == jnp.float32

    # --- check 1: kernel mechanics (same bf16 operands, plain matmul) ---
    noise_used = noise_bf16.astype(jnp.float32)                              # what the kernel saw
    ref_mm = np.asarray(noise_used @ m_final.astype(jnp.float32))
    assert np.allclose(np.asarray(out), ref_mm, atol=1e-4)

    # --- check 2: full forward-pass semantics against an FFT reference ---
    sig = jnp.asarray(env_abs)[None, :] * noise_used                         # (T, N)
    spec = jnp.fft.rfft(sig, norm='ortho') * (transfer_re + 1j * transfer_im)[None, :]
    ref = np.asarray(jnp.fft.irfft(spec, n=N_SAMPLES, norm='ortho'))         # (T, N)
    err = np.abs(np.asarray(out) - ref)
    rel = np.linalg.norm(np.asarray(out) - ref) / (np.linalg.norm(ref) + 1e-12)
    assert err.max() < 5e-4 and rel < 1e-2

    print("KERNEL_OK")
</pallas_src>

<mosaic_0001>
module attributes {stable_mosaic.version = 11 : i64} {
  func.func @_source_excitation_kernel(%arg0: i32, %arg1: memref<16x256xbf16, #tpu.memory_space<vmem>>, %arg2: memref<256x256xbf16, #tpu.memory_space<vmem>>, %arg3: memref<16x256xf32, #tpu.memory_space<vmem>>) attributes {dimension_semantics = [#tpu.dimension_semantics<parallel>], iteration_bounds = array<i64: 4>, scalar_prefetch = 0 : i64, scratch_operands = 0 : i64, tpu.core_type = #tpu.core_type<tc>, window_params = [{transform_indices = @transform_0, window_bounds = array<i64: 16, 256>}, {pipeline_mode = #tpu.pipeline_mode<synchronous>, transform_indices = @transform_1, window_bounds = array<i64: 256, 256>}, {transform_indices = @transform_2, window_bounds = array<i64: 16, 256>}]} {
    %c0 = arith.constant 0 : index
    %c0_0 = arith.constant 0 : index
    %0 = vector.load %arg1[%c0, %c0_0] : memref<16x256xbf16, #tpu.memory_space<vmem>>, vector<16x256xbf16>
    %c0_1 = arith.constant 0 : index
    %c0_2 = arith.constant 0 : index
    %1 = vector.load %arg2[%c0_1, %c0_2] : memref<256x256xbf16, #tpu.memory_space<vmem>>, vector<256x256xbf16>
    %cst = arith.constant dense<0.000000e+00> : vector<16x256xf32>
    %2 = tpu.matmul %0, %1, %cst {dimension_numbers = #tpu.dot_dimension_numbers<[1], [0], [0], [1], [0, 0, 1, 1], [], []>} : vector<16x256xbf16>, vector<256x256xbf16>, vector<16x256xf32> -> vector<16x256xf32>
    %c0_3 = arith.constant 0 : index
    %c0_4 = arith.constant 0 : index
    %3 = vector.load %arg3[%c0_3, %c0_4] : memref<16x256xf32, #tpu.memory_space<vmem>>, vector<16x256xf32>
    tpu.vector_store %arg3[%c0_3, %c0_4], %2 {strides = array<i32>} : memref<16x256xf32, #tpu.memory_space<vmem>>, vector<16x256xf32>,
    return
  }
  func.func @transform_0(%arg0: i32) -> (i32, i32) {
    %c0_i32 = arith.constant 0 : i32
    %c0_i32_0 = arith.constant 0 : i32
    return %arg0, %c0_i32 : i32, i32
  }
  func.func @transform_1(%arg0: i32) -> (i32, i32) {
    %c0_i32 = arith.constant 0 : i32
    %c0_i32_0 = arith.constant 0 : i32
    %c0_i32_1 = arith.constant 0 : i32
    return %c0_i32, %c0_i32_0 : i32, i32
  }
  func.func @transform_2(%arg0: i32) -> (i32, i32) {
    %c0_i32 = arith.constant 0 : i32
    %c0_i32_0 = arith.constant 0 : i32
    return %arg0, %c0_i32 : i32, i32
  }
}

</mosaic_0001>

<llo_original>
// kernel: tpu_custom_call.1
$region0: #{tpu_custom_call.1}
  #allocation0 [shape = 'u32[]', space=smem, size = 0x4, offset = 0x4, fixed_abs, tag = 'smem constant byte address 0x4 - core index']
  #allocation1 [shape = 'u32[144,128]{1,0:T(1,128)}', space=vmem, size = 0x12000, scoped, tag = 'internal scratch']
  %s0 = inlined_call_operand.hbm [shape: bf16[64,256], index: 0, kind: input, shape index: {}]
  %s1 = inlined_call_operand.hbm [shape: bf16[256,256], index: 1, kind: input, shape index: {}]
  %s2 = inlined_call_operand.hbm [shape: f32[64,256], index: 2, kind: output, shape index: {}]
  %s3 = sld [smem:[#allocation0]]
  $region49: #{tpu_custom_call.1} parent=0
    _
  %s5 = ssub.s32 1, %s3
  %s6 = scalar_select 0, %s5, %s3
  $region1: #{tpu_custom_call.1} parent=0
    #allocation2 [shape = 'u8[16384]{0}', space=vmem, size = 0x4000, scoped, tag = 'input window, operand 0']
    #allocation3 [shape = 's32[2]{0}', space=sflag, size = 0x8, scoped, tag = 'scoped memory for tpu_custom_call.1']
    #allocation4 [shape = 's32[2]{0}', space=sflag, size = 0x8, scoped, tag = 'scoped memory for tpu_custom_call.1']
    #allocation5 [shape = 'u8[131072]{0}', space=vmem, size = 0x20000, scoped, tag = 'input window, operand 1, single buffered']
    #allocation6 [shape = 's32[1]{0}', space=sflag, size = 0x4, scoped, tag = 'scoped memory for tpu_custom_call.1']
    #allocation7 [shape = 'u8[32768]{0}', space=vmem, size = 0x8000, scoped, tag = 'output window, operand 0']
    %7 = vsyncpa [#allocation3], 0
    %s8 = scalar_lea.sflag [#allocation3], 1
    %9 = vsyncpa %s8, 0
    %10 = vsyncpa [#allocation6], 0
    %11 = vsyncpa [#allocation4], 0
    %s12 = scalar_lea.sflag [#allocation4], 1
    %13 = vsyncpa %s12, 0
    loop: start=0, step=1, limit=6
    $region2: #{tpu_custom_call.1} parent=1 // loop_pre_header
      _
    $region3: #{tpu_custom_call.1} parent=1 // loop_header
      %s15 = sphi 0, %s19
      %p16 = scmp.ge.s32.totalorder %s15, 6
      %s25 = sphi 0, %s27
      %s28 = sphi 0, %s25
      %s29 = sphi 0, %s28
      %s45 = sphi 0, %s29
      %s49 = sphi 0, %s49
      %s51 = sphi 0, %s49
      %s52 = sphi 0, %s51
      %s66 = sphi 0, %s52
      %s72 = sphi 0, %s74
      %s75 = sphi 0, %s72
      %s76 = sphi 0, %s75
      %s92 = sphi 0, %s76
    $region4: #{tpu_custom_call.1} parent=1 // loop_header_branch
      %18 = sbr.rel (%p16) target = $region8
    $region5: #{tpu_custom_call.1} parent=1 // loop_body
      %s20 = ssub.s32 %s15, 1
      %s21 = ssub.s32 %s15, 2
      %s22 = sadd.s32 %s15, 1
      %s23 = ssub.s32 %s15, %s22
      %p24 = scmp.eq.s32.totalorder %s23, 0
      %s26 = sadd.s32 %s25, 1
      %s27 = scalar_select %p24, %s25, %s26
      %p30 = pneg %p24
      %p31 = scmp.eq.s32.totalorder %s15, 3
      %p32 = por %p30, %p31
      %p33 = scmp.ne.s32.totalorder %s25, %s28
      %p34 = scmp.eq.s32.totalorder %s15, 0
      %p35 = por %p33, %p34
      %p36 = scmp.ne.s32.totalorder %s25, %s28
      %p37 = scmp.eq.s32.totalorder %s20, 3
      %p38 = por %p36, %p37
      %p39 = scmp.ne.s32.totalorder %s28, %s29
      %p40 = scmp.eq.s32.totalorder %s20, 0
      %p41 = por %p39, %p40
      %p42 = scmp.ne.s32.totalorder %s28, %s29
      %p43 = scmp.eq.s32.totalorder %s21, 3
      %p44 = por %p42, %p43
      %p46 = scmp.ne.s32.totalorder %s29, %s45
      %p47 = scmp.eq.s32.totalorder %s21, 0
      %p48 = por %p46, %p47
      %s50 = sadd.s32 %s49, 1
      %p53 = scmp.eq.s32.totalorder %s15, 3
      %p54 = scmp.ne.s32.totalorder %s49, %s51
      %p55 = scmp.eq.s32.totalorder %s15, 0
      %p56 = por %p54, %p55
      %p57 = scmp.ne.s32.totalorder %s49, %s51
      %p58 = scmp.eq.s32.totalorder %s20, 3
      %p59 = por %p57, %p58
      %p60 = scmp.ne.s32.totalorder %s51, %s52
      %p61 = scmp.eq.s32.totalorder %s20, 0
      %p62 = por %p60, %p61
      %p63 = scmp.ne.s32.totalorder %s51, %s52
      %p64 = scmp.eq.s32.totalorder %s21, 3
      %p65 = por %p63, %p64
      %p67 = scmp.ne.s32.totalorder %s52, %s66
      %p68 = scmp.eq.s32.totalorder %s21, 0
      %p69 = por %p67, %p68
      %s70 = ssub.s32 %s15, %s22
      %p71 = scmp.eq.s32.totalorder %s70, 0
      %s73 = sadd.s32 %s72, 1
      %s74 = scalar_select %p71, %s72, %s73
      %p77 = pneg %p71
      %p78 = scmp.eq.s32.totalorder %s15, 3
      %p79 = por %p77, %p78
      %p80 = scmp.ne.s32.totalorder %s72, %s75
      %p81 = scmp.eq.s32.totalorder %s15, 0
      %p82 = por %p80, %p81
      %p83 = scmp.ne.s32.totalorder %s72, %s75
      %p84 = scmp.eq.s32.totalorder %s20, 3
      %p85 = por %p83, %p84
      %p86 = scmp.ne.s32.totalorder %s75, %s76
      %p87 = scmp.eq.s32.totalorder %s20, 0
      %p88 = por %p86, %p87
      %p89 = scmp.ne.s32.totalorder %s75, %s76
      %p90 = scmp.eq.s32.totalorder %s21, 3
      %p91 = por %p89, %p90
      %p93 = scmp.ne.s32.totalorder %s76, %s92
      %p94 = scmp.eq.s32.totalorder %s21, 0
      %p95 = por %p93, %p94
      %p96 = scmp.le.s32.totalorder 1, %s15
      %p97 = scmp.lt.s32.totalorder %s15, 5
      %p98 = pnand %p96, %p97
      %p99 = pneg %p98
      // Predicated region
      $region9: #{tpu_custom_call.1} parent=5 // pred_check
        _
      $region10: #{tpu_custom_call.1} parent=5 // pred_check_branch
        %101 = sbr.rel (%p98) target = $region12
      $region11: #{tpu_custom_call.1} parent=5 // pred_region
        %s102 = ssub.s32 %s15, 1
        // Predicated region
        $region13: #{tpu_custom_call.1} parent=11 // pred_check
          %p103 = pneg %p62
        $region14: #{tpu_custom_call.1} parent=11 // pred_check_branch
          %105 = sbr.rel (%p103) target = $region16
        $region15: #{tpu_custom_call.1} parent=11 // pred_region
          %s107 = ssub.s32 4096, 4096
          %108 = vsyncadd [#allocation6], %s107
          %s109 = sshll.u32 [#allocation5], 4
          %s110 = int_to_ptr.vmem [resolvable:$true] %s109
          %115 = dma.hbm_to_vmem [thread:$0]  %s1, 4096, %s110, [#allocation6], 128, 128, 8
        $region16: #{tpu_custom_call.1} parent=11 // pred_fallthru
          _
      $region12: #{tpu_custom_call.1} parent=5 // pred_fallthru
        _
      %p116 = scmp.lt.s32.totalorder %s15, 4
      // Predicated region
      $region17: #{tpu_custom_call.1} parent=5 // pred_check
        %p117 = pneg %p116
      $region18: #{tpu_custom_call.1} parent=5 // pred_check_branch
        %119 = sbr.rel (%p117) target = $region20
      $region19: #{tpu_custom_call.1} parent=5 // pred_region
        // Predicated region
        $region21: #{tpu_custom_call.1} parent=19 // pred_check
          %p120 = pneg %p35
        $region22: #{tpu_custom_call.1} parent=19 // pred_check_branch
          %122 = sbr.rel (%p120) target = $region24
        $region23: #{tpu_custom_call.1} parent=19 // pred_region
          %s123 = sand.u32 %s25, 1
          %s124 = scalar_lea.sflag [#allocation3], %s123
          %s125 = sand.u32 %s25, 1
          %s126 = smul.addr %s125, 16
          %s127 = scalar_lea.vmem [#allocation2], %s126
          %s128 = smul.u32 2, %s15
          %s130 = ssub.s32 256, 256
          %131 = vsyncadd %s124, %s130
          %s132 = smul.addr %s128, 2
          %s133 = smul.addr %s132, 64
          %s134 = scalar_lea.hbm %s0, %s133
          %s135 = sshll.u32 %s127, 4
          %s136 = int_to_ptr.vmem [resolvable:$true] %s135
          %141 = dma.hbm_to_vmem [thread:$0]  %s134, 256, %s136, %s124, 128, 128, 8
        $region24: #{tpu_custom_call.1} parent=19 // pred_fallthru
          _
      $region20: #{tpu_custom_call.1} parent=5 // pred_fallthru
        _
      %p142 = scmp.le.s32.totalorder 1, %s15
      %p143 = scmp.lt.s32.totalorder %s15, 5
      %p144 = pnand %p142, %p143
      %p145 = pneg %p144
      // Predicated region
      $region25: #{tpu_custom_call.1} parent=5 // pred_check
        _
      $region26: #{tpu_custom_call.1} parent=5 // pred_check_branch
        %147 = sbr.rel (%p144) target = $region28
      $region27: #{tpu_custom_call.1} parent=5 // pred_region
        %s148 = ssub.s32 %s15, 1
        %s149 = sand.u32 %s28, 1
        %s150 = scalar_lea.sflag [#allocation3], %s149
        %s151 = sand.u32 %s28, 1
        %s152 = smul.addr %s151, 16
        %s153 = scalar_lea.vmem [#allocation2], %s152
        // Predicated region
        $region29: #{tpu_custom_call.1} parent=27 // pred_check
          %p154 = pneg %p41
        $region30: #{tpu_custom_call.1} parent=27 // pred_check_branch
          %156 = sbr.rel (%p154) target = $region32
        $region31: #{tpu_custom_call.1} parent=27 // pred_region
          %157 = dma.done %s150, 256
        $region32: #{tpu_custom_call.1} parent=27 // pred_fallthru
          _
        // Predicated region
        $region33: #{tpu_custom_call.1} parent=27 // pred_check
          %p158 = pneg %p62
        $region34: #{tpu_custom_call.1} parent=27 // pred_check_branch
          %160 = sbr.rel (%p158) target = $region36
        $region35: #{tpu_custom_call.1} parent=27 // pred_region
          %161 = dma.done [#allocation6], 4096
        $region36: #{tpu_custom_call.1} parent=27 // pred_fallthru
          _
        %s162 = sand.u32 %s28, 1
        %s163 = scalar_lea.sflag [#allocation3], %s162
        %s164 = sand.u32 %s28, 1
        %s165 = smul.addr %s164, 16
        %s166 = scalar_lea.vmem [#allocation2], %s165
        %p167 = pneg %p41
        %p168 = pneg %p38
        %p169 = pneg %p62
        %p170 = pneg %p59
        %p171 = pneg %p88
        %p172 = pneg %p85
        %s173 = sand.u32 %s75, 1
        %s174 = scalar_lea.sflag [#allocation4], %s173
        %s175 = sand.u32 %s75, 1
        %s176 = smul.addr %s175, 32
        %s177 = scalar_lea.vmem [#allocation7], %s176
        %s178 = smul.u32 2, %s20
        %s179 = smul.u32 2, %s20
        %v180 = vld [vmem:[%s153] sm:$0xff]
        %v181 = vld [vmem:[%s153 + $0x8] sm:$0xff]
        %v182 = vld [vmem:[#allocation5] sm:$0xff]
        %v183 = vld [vmem:[#allocation5 + $0x8] sm:$0xff]
        %v184 = vld [vmem:[#allocation5 + $0x10] sm:$0xff]
        %v185 = vld [vmem:[#allocation5 + $0x18] sm:$0xff]
        %v186 = vld [vmem:[#allocation5 + $0x20] sm:$0xff]
        %v187 = vld [vmem:[#allocation5 + $0x28] sm:$0xff]
        %v188 = vld [vmem:[#allocation5 + $0x30] sm:$0xff]
        %v189 = vld [vmem:[#allocation5 + $0x38] sm:$0xff]
        %v190 = vld [vmem:[#allocation5 + $0x40] sm:$0xff]
        %v191 = vld [vmem:[#allocation5 + $0x48] sm:$0xff]
        %v192 = vld [vmem:[#allocation5 + $0x50] sm:$0xff]
        %v193 = vld [vmem:[#allocation5 + $0x58] sm:$0xff]
        %v194 = vld [vmem:[#allocation5 + $0x60] sm:$0xff]
        %v195 = vld [vmem:[#allocation5 + $0x68] sm:$0xff]
        %v196 = vld [vmem:[#allocation5 + $0x70] sm:$0xff]
        %v197 = vld [vmem:[#allocation5 + $0x78] sm:$0xff]
        %v198 = vld [vmem:[#allocation5 + $0x80] sm:$0xff]
        %v199 = vld [vmem:[#allocation5 + $0x88] sm:$0xff]
        %v200 = vld [vmem:[#allocation5 + $0x90] sm:$0xff]
        %v201 = vld [vmem:[#allocation5 + $0x98] sm:$0xff]
        %v202 = vld [vmem:[#allocation5 + $0xa0] sm:$0xff]
        %v203 = vld [vmem:[#allocation5 + $0xa8] sm:$0xff]
        %v204 = vld [vmem:[#allocation5 + $0xb0] sm:$0xff]
        %v205 = vld [vmem:[#allocation5 + $0xb8] sm:$0xff]
        %v206 = vld [vmem:[#allocation5 + $0xc0] sm:$0xff]
        %v207 = vld [vmem:[#allocation5 + $0xc8] sm:$0xff]
        %v208 = vld [vmem:[#allocation5 + $0xd0] sm:$0xff]
        %v209 = vld [vmem:[#allocation5 + $0xd8] sm:$0xff]
        %v210 = vld [vmem:[#allocation5 + $0xe0] sm:$0xff]
        %v211 = vld [vmem:[#allocation5 + $0xe8] sm:$0xff]
        %v212 = vld [vmem:[#allocation5 + $0xf0] sm:$0xff]
        %v213 = vld [vmem:[#allocation5 + $0xf8] sm:$0xff]
        %v216 = vunpack.c.l.b16 %v180
        %v217 = vunpack.c.h.b16 %v180
        %v218 = vunpack.c.l.b16 %v181
        %v219 = vunpack.c.h.b16 %v181
        %v220 = vpack.c.b16 %v218, %v216
        %v221 = vpack.c.b16 %v219, %v217
        %v256 = vunpack.c.l.b16 %v182
        %v257 = vunpack.c.h.b16 %v182
        %v258 = vunpack.c.l.b16 %v183
        %v259 = vunpack.c.h.b16 %v183
        %v260 = vunpack.c.l.b16 %v184
        %v261 = vunpack.c.h.b16 %v184
        %v262 = vunpack.c.l.b16 %v185
        %v263 = vunpack.c.h.b16 %v185
        %v264 = vunpack.c.l.b16 %v186
        %v265 = vunpack.c.h.b16 %v186
        %v266 = vunpack.c.l.b16 %v187
        %v267 = vunpack.c.h.b16 %v187
        %v268 = vunpack.c.l.b16 %v188
        %v269 = vunpack.c.h.b16 %v188
        %v270 = vunpack.c.l.b16 %v189
        %v271 = vunpack.c.h.b16 %v189
        %v272 = vunpack.c.l.b16 %v190
        %v273 = vunpack.c.h.b16 %v190
        %v274 = vunpack.c.l.b16 %v191
        %v275 = vunpack.c.h.b16 %v191
        %v276 = vunpack.c.l.b16 %v192
        %v277 = vunpack.c.h.b16 %v192
        %v278 = vunpack.c.l.b16 %v193
        %v279 = vunpack.c.h.b16 %v193
        %v280 = vunpack.c.l.b16 %v194
        %v281 = vunpack.c.h.b16 %v194
        %v282 = vunpack.c.l.b16 %v195
        %v283 = vunpack.c.h.b16 %v195
        %v284 = vunpack.c.l.b16 %v196
        %v285 = vunpack.c.h.b16 %v196
        %v286 = vunpack.c.l.b16 %v197
        %v287 = vunpack.c.h.b16 %v197
        %v288 = vunpack.c.l.b16 %v198
        %v289 = vunpack.c.h.b16 %v198
        %v290 = vunpack.c.l.b16 %v199
        %v291 = vunpack.c.h.b16 %v199
        %v292 = vunpack.c.l.b16 %v200
        %v293 = vunpack.c.h.b16 %v200
        %v294 = vunpack.c.l.b16 %v201
        %v295 = vunpack.c.h.b16 %v201
        %v296 = vunpack.c.l.b16 %v202
        %v297 = vunpack.c.h.b16 %v202
        %v298 = vunpack.c.l.b16 %v203
        %v299 = vunpack.c.h.b16 %v203
        %v300 = vunpack.c.l.b16 %v204
        %v301 = vunpack.c.h.b16 %v204
        %v302 = vunpack.c.l.b16 %v205
        %v303 = vunpack.c.h.b16 %v205
        %v304 = vunpack.c.l.b16 %v206
        %v305 = vunpack.c.h.b16 %v206
        %v306 = vunpack.c.l.b16 %v207
        %v307 = vunpack.c.h.b16 %v207
        %v308 = vunpack.c.l.b16 %v208
        %v309 = vunpack.c.h.b16 %v208
        %v310 = vunpack.c.l.b16 %v209
        %v311 = vunpack.c.h.b16 %v209
        %v312 = vunpack.c.l.b16 %v210
        %v313 = vunpack.c.h.b16 %v210
        %v314 = vunpack.c.l.b16 %v211
        %v315 = vunpack.c.h.b16 %v211
        %v316 = vunpack.c.l.b16 %v212
        %v317 = vunpack.c.h.b16 %v212
        %v318 = vunpack.c.l.b16 %v213
        %v319 = vunpack.c.h.b16 %v213
        %v320 = vpack.c.b16 %v258, %v256
        %v321 = vpack.c.b16 %v259, %v257
        %v322 = vpack.c.b16 %v262, %v260
        %v323 = vpack.c.b16 %v263, %v261
        %v324 = vpack.c.b16 %v266, %v264
        %v325 = vpack.c.b16 %v267, %v265
        %v326 = vpack.c.b16 %v270, %v268
        %v327 = vpack.c.b16 %v271, %v269
        %v328 = vpack.c.b16 %v274, %v272
        %v329 = vpack.c.b16 %v275, %v273
        %v330 = vpack.c.b16 %v278, %v276
        %v331 = vpack.c.b16 %v279, %v277
        %v332 = vpack.c.b16 %v282, %v280
        %v333 = vpack.c.b16 %v283, %v281
        %v334 = vpack.c.b16 %v286, %v284
        %v335 = vpack.c.b16 %v287, %v285
        %v336 = vpack.c.b16 %v290, %v288
        %v337 = vpack.c.b16 %v291, %v289
        %v338 = vpack.c.b16 %v294, %v292
        %v339 = vpack.c.b16 %v295, %v293
        %v340 = vpack.c.b16 %v298, %v296
        %v341 = vpack.c.b16 %v299, %v297
        %v342 = vpack.c.b16 %v302, %v300
        %v343 = vpack.c.b16 %v303, %v301
        %v344 = vpack.c.b16 %v306, %v304
        %v345 = vpack.c.b16 %v307, %v305
        %v346 = vpack.c.b16 %v310, %v308
        %v347 = vpack.c.b16 %v311, %v309
        %v348 = vpack.c.b16 %v314, %v312
        %v349 = vpack.c.b16 %v315, %v313
        %v350 = vpack.c.b16 %v318, %v316
        %v351 = vpack.c.b16 %v319, %v317
        %384 = vmatprep.subr.bf16.mxu0 %v335
        %385 = vmatpush1.bf16.msra.mxu0 %v334
        %386 = vmatprep.subr.bf16.mxu0 %v333
        %387 = vmatpush1.bf16.msra.mxu0 %v332
        %388 = vmatprep.subr.bf16.mxu0 %v331
        %389 = vmatpush1.bf16.msra.mxu0 %v330
        %390 = vmatprep.subr.bf16.mxu0 %v329
        %391 = vmatpush1.bf16.msra.mxu0 %v328
        %392 = vmatprep.subr.bf16.mxu0 %v327
        %393 = vmatpush1.bf16.msra.mxu0 %v326
        %394 = vmatprep.subr.bf16.mxu0 %v325
        %395 = vmatpush1.bf16.msra.mxu0 %v324
        %396 = vmatprep.subr.bf16.mxu0 %v323
        %397 = vmatpush1.bf16.msra.mxu0 %v322
        %398 = vmatprep.subr.bf16.mxu0 %v321
        %399 = vmatpush1.bf16.msra.mxu0 %v320
        %400 = vmatprep.subr.bf16.mxu0 %v351
        %401 = vmatpush2.bf16.msra.mxu0 %v350
        %402 = vmatprep.subr.bf16.mxu0 %v349
        %403 = vmatpush2.bf16.msra.mxu0 %v348
        %404 = vmatprep.subr.bf16.mxu0 %v347
        %405 = vmatpush2.bf16.msra.mxu0 %v346
        %406 = vmatprep.subr.bf16.mxu0 %v345
        %407 = vmatpush2.bf16.msra.mxu0 %v344
        %408 = vmatprep.subr.bf16.mxu0 %v343
        %409 = vmatpush2.bf16.msra.mxu0 %v342
        %410 = vmatprep.subr.bf16.mxu0 %v341
        %411 = vmatpush2.bf16.msra.mxu0 %v340
        %412 = vmatprep.subr.bf16.mxu0 %v339
        %413 = vmatpush2.bf16.msra.mxu0 %v338
        %414 = vmatprep.subr.bf16.mxu0 %v337
        %415 = vmatpush2.bf16.msra.mxu0 %v336
        %416 = vmatprep.mubr.bf16.mxu0 %v221
        %417 = vmatmul.mubr.bf16.gmra.mxu0 %v220
        %v418 = vpop.f32.mrf.mxu0
        %v419 = vadd.f32 0.0, %v418
        %v420 = vpop.f32.mrf.mxu0
        %v421 = vadd.f32 0.0, %v420
        %v422 = vpop.f32.mrf.mxu0
        %v423 = vadd.f32 0.0, %v422
        %v424 = vpop.f32.mrf.mxu0
        %v425 = vadd.f32 0.0, %v424
        %426 = vdwg.mxu0
        %427 = vst [vmem:[%s177] sm:$0xff] %v419
        %428 = vst [vmem:[%s177 + $0x8] sm:$0xff] %v421
        %429 = vst [vmem:[%s177 + $0x10] sm:$0xff] %v423
        %430 = vst [vmem:[%s177 + $0x18] sm:$0xff] %v425
        %s431 = sand.u32 %s75, 1
        %s432 = scalar_lea.sflag [#allocation4], %s431
        %s433 = sand.u32 %s75, 1
        %s434 = smul.addr %s433, 32
        %s435 = scalar_lea.vmem [#allocation7], %s434
        // Predicated region
        $region37: #{tpu_custom_call.1} parent=27 // pred_check
          %p436 = pneg %p85
        $region38: #{tpu_custom_call.1} parent=27 // pred_check_branch
          %438 = sbr.rel (%p436) target = $region40
        $region39: #{tpu_custom_call.1} parent=27 // pred_region
          %s439 = smul.u32 2, %s20
          %s441 = ssub.s32 512, 512
          %442 = vsyncadd %s432, %s441
          %s443 = smul.addr %s439, 2
          %s444 = smul.addr %s443, 128
          %s445 = scalar_lea.hbm %s2, %s444
          %s446 = sshll.u32 %s435, 4
          %s447 = int_to_ptr.vmem [resolvable:$true] %s446
          %452 = dma.vmem_to_hbm [thread:$0]  %s447, 512, %s445, %s432, 256, 256, 16
        $region40: #{tpu_custom_call.1} parent=27 // pred_fallthru
          _
      $region28: #{tpu_custom_call.1} parent=5 // pred_fallthru
        _
      %p453 = scmp.le.s32.totalorder 2, %s15
      // Predicated region
      $region41: #{tpu_custom_call.1} parent=5 // pred_check
        %p454 = pneg %p453
      $region42: #{tpu_custom_call.1} parent=5 // pred_check_branch
        %456 = sbr.rel (%p454) target = $region44
      $region43: #{tpu_custom_call.1} parent=5 // pred_region
        %s457 = ssub.s32 %s15, 2
        // Predicated region
        $region45: #{tpu_custom_call.1} parent=43 // pred_check
          %p458 = pneg %p91
        $region46: #{tpu_custom_call.1} parent=43 // pred_check_branch
          %460 = sbr.rel (%p458) target = $region48
        $region47: #{tpu_custom_call.1} parent=43 // pred_region
          %s461 = sand.u32 %s76, 1
          %s462 = scalar_lea.sflag [#allocation4], %s461
          %s463 = sand.u32 %s76, 1
          %s464 = smul.addr %s463, 32
          %s465 = scalar_lea.vmem [#allocation7], %s464
          %466 = dma.done %s462, 512
        $region48: #{tpu_custom_call.1} parent=43 // pred_fallthru
          _
      $region44: #{tpu_custom_call.1} parent=5 // pred_fallthru
        _
    $region6: #{tpu_custom_call.1} parent=1 // loop_footer
      %s19 = sadd.s32 1, %s15
    $region7: #{tpu_custom_call.1} parent=1 // loop_footer_branch
      %14 = sbr.rel target = $region3
    $region8: #{tpu_custom_call.1} parent=1 // loop_exit
      _
    %467 = vsyncpa [#allocation3], 1
    %s468 = scalar_lea.sflag [#allocation3], 1
    %469 = vsyncpa %s468, 1
    %470 = vsyncpa [#allocation6], 1
    %471 = vsyncpa [#allocation4], 1
    %s472 = scalar_lea.sflag [#allocation4], 1
    %473 = vsyncpa %s472, 1

</llo_original>
